<compile_context>
chip_gen: v5e
topology: v5e:2x2
jax: 0.10.0
libtpu: 0.0.40
codegen_flags: <defaults>
</compile_context>

<pallas_src>
import functools

import jax
import jax.numpy as jnp
from jax.experimental import pallas as pl
from jax.experimental.pallas import tpu as pltpu


def _attention_block_kernel(x_ref, w_ref, b_ref, gamma_ref, beta_ref, o_ref,
                            *, use_bf16_matmul: bool):
    """One grid step processes a (BB, S, D) block of batches."""
    BB, S, D = x_ref.shape
    H = w_ref.shape[1]
    mm_dtype = jnp.bfloat16 if use_bf16_matmul else jnp.float32

    # Cast matmul operands exactly once (no intermediate f32 copy of x).
    x2d = x_ref[...].reshape(BB * S, D).astype(mm_dtype)   # (BB*S, D)
    w = w_ref[...].astype(mm_dtype)                         # (D, H)  (= W^T)
    b = b_ref[...].astype(jnp.float32)                      # (1, H)

    # Linear for every row of the block in a single MXU call:
    # (BB*S, D) @ (D, H). Folding batches into rows (sublane-aligned, S=8)
    # improves MXU sublane occupancy vs. a per-batch matmul.
    lin2d = jnp.dot(x2d, w, preferred_element_type=jnp.float32) + b
    lin = lin2d.reshape(BB, S, H)                            # (BB, S, H), f32

    # attn_scores = lin @ lin^T, expressed as a contraction over H so the MXU
    # consumes the transposed operand directly (no XLU transpose of lin).
    # TODO(synk): if S grows beyond toy sizes, tile KV flash-style (online
    # softmax) instead of materializing (S, S); size tq/tk per generation
    # (v7x: 64 MiB physical / 32 MiB default-scoped VMEM, v5e/v6e: 128 MiB
    # physical with 16/32 MiB default scope) counting 2x for double-buffering,
    # and set vmem_limit_bytes explicitly in CompilerParams.
    lin_mm = lin.astype(mm_dtype)
    scores = jax.lax.dot_general(
        lin_mm, lin_mm,
        dimension_numbers=(((2,), (2,)), ((0,), (0,))),
        preferred_element_type=jnp.float32)                  # (BB, S, S)

    # Softmax over the last dim in f32. Exact divide: the EUP has huge slack
    # here (exp dominates), so an approximate vrcp buys nothing and only
    # costs accuracy.
    m = jnp.max(scores, axis=-1, keepdims=True)
    e = jnp.exp(scores - m)
    attn = e / jnp.sum(e, axis=-1, keepdims=True)

    # TODO(synk): nn.Dropout(0.2) on attn is identity in eval mode; training
    # mode (random mask + 1/(1-p) rescale of the attention weights) is not
    # implemented here.

    # attended_output = attn @ lin
    attended = jax.lax.dot_general(
        attn.astype(mm_dtype), lin_mm,
        dimension_numbers=(((2,), (1,)), ((0,), (0,))),
        preferred_element_type=jnp.float32)                  # (BB, S, H)

    # layer_norm(attended + lin) over the hidden dim — f32 math, f32 lin
    # (residual + LN keep full precision regardless of matmul dtype).
    y = attended + lin
    mean = jnp.mean(y, axis=-1, keepdims=True)
    var = jnp.mean((y - mean) ** 2, axis=-1, keepdims=True)
    y_norm = (y - mean) * jax.lax.rsqrt(var + 1e-5)
    out = (y_norm * gamma_ref[...].astype(jnp.float32)
           + beta_ref[...].astype(jnp.float32))

    # H=32 < 128 lanes -> masked partial stores, but the whole output here is
    # tiny; revisit a lane-dense (S*H) store layout only at production sizes.
    o_ref[...] = out.astype(o_ref.dtype)


# Per-grid-step fixed overhead is ~0.35 us; only split work across
# TensorCores when each step carries well more data than that overhead hides.
_MIN_BYTES_PER_STEP = 256 * 1024


def _num_batch_blocks(B: int, S: int, D: int, itemsize: int) -> int:
    """Grid size along the batch axis (1 or 2).

    Splitting 2-ways only pays on 2-TC chips (v7x) AND when per-step work is
    well above the per-step overhead; at toy sizes always collapse to 1 step.
    """
    if B < 2 or B % 2 != 0:
        return 1
    per_step_bytes = (B // 2) * S * D * itemsize
    if per_step_bytes < _MIN_BYTES_PER_STEP:
        return 1

    two_cores = False
    try:
        info = pltpu.get_tpu_info()
        num_cores = (getattr(info, "num_cores", None)
                     or getattr(info, "num_tensorcores", None))
        if num_cores is None:
            raise AttributeError("no core-count field on TpuInfo")
        two_cores = int(num_cores) >= 2
    except Exception:
        try:
            kind = jax.devices()[0].device_kind.lower()
            two_cores = ("v7" in kind) or ("7x" in kind)
        except Exception:
            two_cores = False
    return 2 if two_cores else 1


def simply_attention_block(x, w, b, gamma, beta, *, use_bf16_matmul=True):
    """x: (B, S, D); w: (D, H); b, gamma, beta: (1, H). Returns (B, S, H).

    use_bf16_matmul=True (default) runs the three matmuls in bf16 on the
    bf16-native MXU (all of v5e/v6e/v7x); softmax, residual and LayerNorm
    stay f32. Pass False for bit-tighter f32 matmuls.
    Dropout(0.2) is eval-mode identity (no training-mode masking).
    """
    B, S, D = x.shape
    H = w.shape[1]
    nblocks = _num_batch_blocks(B, S, D, x.dtype.itemsize)
    BB = B // nblocks

    # Advisory cost estimate so XLA schedules around this tiny custom call.
    # NOTE: at toy shapes this kernel is launch/DMA-overhead bound; the real
    # lever is batching more work per pallas_call (bigger B, or fusing
    # adjacent layers into this kernel), not body-level tweaks.
    flops = 2 * B * S * D * H + 2 * (2 * B * S * S * H) + 10 * B * S * H
    transcendentals = B * S * S + 2 * B * S          # exp + rsqrt
    bytes_accessed = 4 * (x.size + w.size + b.size + gamma.size + beta.size
                          + B * S * H)

    kernel = functools.partial(_attention_block_kernel,
                               use_bf16_matmul=use_bf16_matmul)

    return pl.pallas_call(
        kernel,
        out_shape=jax.ShapeDtypeStruct((B, S, H), x.dtype),
        grid_spec=pltpu.PrefetchScalarGridSpec(
            num_scalar_prefetch=0,
            grid=(nblocks,),
            in_specs=[
                pl.BlockSpec((BB, S, D), lambda i: (i, 0, 0)),
                pl.BlockSpec((D, H), lambda i: (0, 0)),
                pl.BlockSpec((1, H), lambda i: (0, 0)),
                pl.BlockSpec((1, H), lambda i: (0, 0)),
                pl.BlockSpec((1, H), lambda i: (0, 0)),
            ],
            out_specs=pl.BlockSpec((BB, S, H), lambda i: (i, 0, 0)),
        ),
        # TODO(synk): when the flash-style tiling lands, add
        # vmem_limit_bytes=... here, sized per generation (v7x gets half the
        # VMEM of v5e/v6e).
        compiler_params=pltpu.CompilerParams(
            dimension_semantics=("parallel",)),
        cost_estimate=pl.CostEstimate(
            flops=flops,
            transcendentals=transcendentals,
            bytes_accessed=bytes_accessed),
    )(x, w, b, gamma, beta)


def _reference(x, w, b, gamma, beta):
    lin = jnp.einsum("bsd,dh->bsh", x, w) + b[None]
    scores = jnp.einsum("bsh,bth->bst", lin, lin)
    attn = jax.nn.softmax(scores, axis=-1)
    attended = jnp.einsum("bst,bth->bsh", attn, lin)
    y = attended + lin
    mean = jnp.mean(y, axis=-1, keepdims=True)
    var = jnp.mean((y - mean) ** 2, axis=-1, keepdims=True)
    return (y - mean) / jnp.sqrt(var + 1e-5) * gamma[None] + beta[None]


if __name__ == "__main__":
    B, S, D, H = 2, 8, 16, 32   # batch, seq, input_size, hidden_size

    key = jax.random.PRNGKey(0)
    kx, kw, kb = jax.random.split(key, 3)

    x = jax.random.normal(kx, (B, S, D), dtype=jnp.float32)

    # Deterministic parameter init (mimics nn.Linear uniform(-1/sqrt(D), 1/sqrt(D)))
    bound = 1.0 / (D ** 0.5)
    w = jax.random.uniform(kw, (D, H), minval=-bound, maxval=bound, dtype=jnp.float32)
    b = jax.random.uniform(kb, (1, H), minval=-bound, maxval=bound, dtype=jnp.float32)
    gamma = jnp.ones((1, H), dtype=jnp.float32)   # LayerNorm weight
    beta = jnp.zeros((1, H), dtype=jnp.float32)   # LayerNorm bias

    ref = _reference(x, w, b, gamma, beta)

    # f32-matmul path: exact softmax divide -> tight tolerance restored.
    out_f32 = jax.block_until_ready(
        simply_attention_block(x, w, b, gamma, beta, use_bf16_matmul=False))
    assert out_f32.shape == (B, S, H)
    assert jnp.allclose(out_f32, ref, atol=1e-4, rtol=1e-4), \
        "f32 path mismatch vs reference"

    # Default bf16-matmul path: validated with a bf16-appropriate tolerance.
    out_bf16 = jax.block_until_ready(
        simply_attention_block(x, w, b, gamma, beta))
    assert out_bf16.shape == (B, S, H)
    assert jnp.allclose(out_bf16, ref, atol=2e-2, rtol=2e-2), \
        "bf16 path mismatch vs reference"

    print("KERNEL_OK")
</pallas_src>

<mosaic_0001>
module attributes {stable_mosaic.version = 11 : i64} {
  func.func @_attention_block_kernel(%arg0: i32, %arg1: memref<2x8x16xf32, #tpu.memory_space<vmem>>, %arg2: memref<16x32xf32, #tpu.memory_space<vmem>>, %arg3: memref<1x32xf32, #tpu.memory_space<vmem>>, %arg4: memref<1x32xf32, #tpu.memory_space<vmem>>, %arg5: memref<1x32xf32, #tpu.memory_space<vmem>>, %arg6: memref<2x8x32xf32, #tpu.memory_space<vmem>>) attributes {dimension_semantics = [#tpu.dimension_semantics<parallel>], iteration_bounds = array<i64: 1>, scalar_prefetch = 0 : i64, scratch_operands = 0 : i64, tpu.core_type = #tpu.core_type<tc>, window_params = [{transform_indices = @transform_0, window_bounds = array<i64: 2, 8, 16>}, {pipeline_mode = #tpu.pipeline_mode<synchronous>, transform_indices = @transform_1, window_bounds = array<i64: 16, 32>}, {pipeline_mode = #tpu.pipeline_mode<synchronous>, transform_indices = @transform_2, window_bounds = array<i64: 1, 32>}, {pipeline_mode = #tpu.pipeline_mode<synchronous>, transform_indices = @transform_3, window_bounds = array<i64: 1, 32>}, {pipeline_mode = #tpu.pipeline_mode<synchronous>, transform_indices = @transform_4, window_bounds = array<i64: 1, 32>}, {transform_indices = @transform_5, window_bounds = array<i64: 2, 8, 32>}]} {
    %c0 = arith.constant 0 : index
    %c0_0 = arith.constant 0 : index
    %c0_1 = arith.constant 0 : index
    %0 = vector.load %arg1[%c0, %c0_0, %c0_1] : memref<2x8x16xf32, #tpu.memory_space<vmem>>, vector<2x8x16xf32>
    %1 = vector.shape_cast %0 : vector<2x8x16xf32> to vector<16x16xf32>
    %c0_2 = arith.constant 0 : index
    %c0_3 = arith.constant 0 : index
    %2 = vector.load %arg2[%c0_2, %c0_3] : memref<16x32xf32, #tpu.memory_space<vmem>>, vector<16x32xf32>
    %c0_4 = arith.constant 0 : index
    %c0_5 = arith.constant 0 : index
    %3 = vector.load %arg3[%c0_4, %c0_5] : memref<1x32xf32, #tpu.memory_space<vmem>>, vector<1x32xf32>
    %cst = arith.constant dense<0.000000e+00> : vector<16x32xf32>
    %4 = tpu.matmul %1, %2, %cst {dimension_numbers = #tpu.dot_dimension_numbers<[1], [0], [0], [1], [0, 0, 1, 1], [], []>} : vector<16x16xf32>, vector<16x32xf32>, vector<16x32xf32> -> vector<16x32xf32>
    %5 = vector.broadcast %3 : vector<1x32xf32> to vector<16x32xf32>
    %6 = arith.addf %4, %5 : vector<16x32xf32>
    %7 = vector.shape_cast %6 : vector<16x32xf32> to vector<2x8x32xf32>
    %cst_6 = arith.constant dense<0.000000e+00> : vector<2x8x8xf32>
    %8 = tpu.matmul %7, %7, %cst_6 {dimension_numbers = #tpu.dot_dimension_numbers<[2], [2], [1], [1], [0, 0, 0, 1, 1, 1], [0], [0]>} : vector<2x8x32xf32>, vector<2x8x32xf32>, vector<2x8x8xf32> -> vector<2x8x8xf32>
    %cst_7 = arith.constant dense<0xFF800000> : vector<2x8xf32>
    %9 = vector.multi_reduction <maximumf>, %8, %cst_7 [2] : vector<2x8x8xf32> to vector<2x8xf32>
    %10 = vector.shape_cast %9 : vector<2x8xf32> to vector<2x8x1xf32>
    %11 = vector.broadcast %10 : vector<2x8x1xf32> to vector<2x8x8xf32>
    %12 = arith.subf %8, %11 : vector<2x8x8xf32>
    %13 = math.exp %12 : vector<2x8x8xf32>
    %cst_8 = arith.constant dense<0.000000e+00> : vector<2x8xf32>
    %14 = vector.multi_reduction <add>, %13, %cst_8 [2] : vector<2x8x8xf32> to vector<2x8xf32>
    %15 = vector.shape_cast %14 : vector<2x8xf32> to vector<2x8x1xf32>
    %16 = vector.broadcast %15 : vector<2x8x1xf32> to vector<2x8x8xf32>
    %17 = arith.divf %13, %16 : vector<2x8x8xf32>
    %cst_9 = arith.constant dense<0.000000e+00> : vector<2x8x32xf32>
    %18 = tpu.matmul %17, %7, %cst_9 {dimension_numbers = #tpu.dot_dimension_numbers<[2], [1], [1], [2], [0, 0, 0, 1, 1, 2], [0], [0]>} : vector<2x8x8xf32>, vector<2x8x32xf32>, vector<2x8x32xf32> -> vector<2x8x32xf32>
    %19 = arith.addf %18, %7 : vector<2x8x32xf32>
    %cst_10 = arith.constant dense<0.000000e+00> : vector<2x8xf32>
    %20 = vector.multi_reduction <add>, %19, %cst_10 [2] : vector<2x8x32xf32> to vector<2x8xf32>
    %21 = vector.shape_cast %20 : vector<2x8xf32> to vector<2x8x1xf32>
    %cst_11 = arith.constant 3.200000e+01 : f32
    %22 = vector.broadcast %cst_11 : f32 to vector<2x8x1xf32>
    %23 = arith.divf %21, %22 : vector<2x8x1xf32>
    %24 = vector.broadcast %23 : vector<2x8x1xf32> to vector<2x8x32xf32>
    %25 = arith.subf %19, %24 : vector<2x8x32xf32>
    %26 = arith.mulf %25, %25 : vector<2x8x32xf32>
    %cst_12 = arith.constant dense<0.000000e+00> : vector<2x8xf32>
    %27 = vector.multi_reduction <add>, %26, %cst_12 [2] : vector<2x8x32xf32> to vector<2x8xf32>
    %28 = vector.shape_cast %27 : vector<2x8xf32> to vector<2x8x1xf32>
    %cst_13 = arith.constant 3.200000e+01 : f32
    %29 = vector.broadcast %cst_13 : f32 to vector<2x8x1xf32>
    %30 = arith.divf %28, %29 : vector<2x8x1xf32>
    %31 = vector.broadcast %23 : vector<2x8x1xf32> to vector<2x8x32xf32>
    %32 = arith.subf %19, %31 : vector<2x8x32xf32>
    %cst_14 = arith.constant 9.99999974E-6 : f32
    %33 = vector.broadcast %cst_14 : f32 to vector<2x8x1xf32>
    %34 = arith.addf %30, %33 : vector<2x8x1xf32>
    %35 = math.rsqrt %34 : vector<2x8x1xf32>
    %36 = vector.broadcast %35 : vector<2x8x1xf32> to vector<2x8x32xf32>
    %37 = arith.mulf %32, %36 : vector<2x8x32xf32>
    %c0_15 = arith.constant 0 : index
    %c0_16 = arith.constant 0 : index
    %38 = vector.load %arg4[%c0_15, %c0_16] : memref<1x32xf32, #tpu.memory_space<vmem>>, vector<1x32xf32>
    %39 = vector.shape_cast %38 : vector<1x32xf32> to vector<1x1x32xf32>
    %40 = vector.broadcast %39 : vector<1x1x32xf32> to vector<2x8x32xf32>
    %41 = arith.mulf %37, %40 : vector<2x8x32xf32>
    %c0_17 = arith.constant 0 : index
    %c0_18 = arith.constant 0 : index
    %42 = vector.load %arg5[%c0_17, %c0_18] : memref<1x32xf32, #tpu.memory_space<vmem>>, vector<1x32xf32>
    %43 = vector.shape_cast %42 : vector<1x32xf32> to vector<1x1x32xf32>
    %44 = vector.broadcast %43 : vector<1x1x32xf32> to vector<2x8x32xf32>
    %45 = arith.addf %41, %44 : vector<2x8x32xf32>
    %c0_19 = arith.constant 0 : index
    %c0_20 = arith.constant 0 : index
    %c0_21 = arith.constant 0 : index
    %46 = vector.load %arg6[%c0_19, %c0_20, %c0_21] : memref<2x8x32xf32, #tpu.memory_space<vmem>>, vector<2x8x32xf32>
    tpu.vector_store %arg6[%c0_19, %c0_20, %c0_21], %45 {strides = array<i32>} : memref<2x8x32xf32, #tpu.memory_space<vmem>>, vector<2x8x32xf32>,
    return
  }
  func.func @transform_0(%arg0: i32) -> (i32, i32, i32) {
    %c0_i32 = arith.constant 0 : i32
    %c0_i32_0 = arith.constant 0 : i32
    %c0_i32_1 = arith.constant 0 : i32
    return %arg0, %c0_i32, %c0_i32_0 : i32, i32, i32
  }
  func.func @transform_1(%arg0: i32) -> (i32, i32) {
    %c0_i32 = arith.constant 0 : i32
    %c0_i32_0 = arith.constant 0 : i32
    %c0_i32_1 = arith.constant 0 : i32
    return %c0_i32, %c0_i32_0 : i32, i32
  }
  func.func @transform_2(%arg0: i32) -> (i32, i32) {
    %c0_i32 = arith.constant 0 : i32
    %c0_i32_0 = arith.constant 0 : i32
    %c0_i32_1 = arith.constant 0 : i32
    return %c0_i32, %c0_i32_0 : i32, i32
  }
  func.func @transform_3(%arg0: i32) -> (i32, i32) {
    %c0_i32 = arith.constant 0 : i32
    %c0_i32_0 = arith.constant 0 : i32
    %c0_i32_1 = arith.constant 0 : i32
    return %c0_i32, %c0_i32_0 : i32, i32
  }
  func.func @transform_4(%arg0: i32) -> (i32, i32) {
    %c0_i32 = arith.constant 0 : i32
    %c0_i32_0 = arith.constant 0 : i32
    %c0_i32_1 = arith.constant 0 : i32
    return %c0_i32, %c0_i32_0 : i32, i32
  }
  func.func @transform_5(%arg0: i32) -> (i32, i32, i32) {
    %c0_i32 = arith.constant 0 : i32
    %c0_i32_0 = arith.constant 0 : i32
    %c0_i32_1 = arith.constant 0 : i32
    return %arg0, %c0_i32, %c0_i32_0 : i32, i32, i32
  }
}

</mosaic_0001>

<llo_original>
// kernel: tpu_custom_call.1
$region0: #{tpu_custom_call.1}
  #allocation0 [shape = 'u32[]', space=smem, size = 0x4, offset = 0x4, fixed_abs, tag = 'smem constant byte address 0x4 - core index']
  #allocation1 [shape = 'u32[72,128]{1,0:T(1,128)}', space=vmem, size = 0x9000, scoped, tag = 'internal scratch']
  %s0 = inlined_call_operand.hbm [shape: f32[2,8,16], index: 0, kind: input, shape index: {}]
  %s1 = inlined_call_operand.hbm [shape: f32[16,32], index: 1, kind: input, shape index: {}]
  %s2 = inlined_call_operand.vmem [shape: f32[1,32], index: 2, kind: input, shape index: {}]
  %s3 = inlined_call_operand.vmem [shape: f32[1,32], index: 3, kind: input, shape index: {}]
  %s4 = inlined_call_operand.vmem [shape: f32[1,32], index: 4, kind: input, shape index: {}]
  %s5 = inlined_call_operand.hbm [shape: f32[2,8,32], index: 5, kind: output, shape index: {}]
  %s6 = sld [smem:[#allocation0]]
  $region38: #{tpu_custom_call.1} parent=0
    _
  %s8 = ssub.s32 1, %s6
  %s9 = scalar_select 0, %s8, %s6
  $region1: #{tpu_custom_call.1} parent=0
    #allocation2 [shape = 'u8[8192]{0}', space=vmem, size = 0x2000, scoped, tag = 'input window, operand 0, single buffered']
    #allocation3 [shape = 's32[1]{0}', space=sflag, size = 0x4, scoped, tag = 'scoped memory for tpu_custom_call.1']
    #allocation4 [shape = 's32[1]{0}', space=sflag, size = 0x4, scoped, tag = 'scoped memory for tpu_custom_call.1']
    #allocation5 [shape = 'u8[8192]{0}', space=vmem, size = 0x2000, scoped, tag = 'input window, operand 1, single buffered']
    #allocation6 [shape = 's32[1]{0}', space=sflag, size = 0x4, scoped, tag = 'scoped memory for tpu_custom_call.1']
    #allocation7 [shape = 'u8[8192]{0}', space=vmem, size = 0x2000, scoped, tag = 'output window, operand 0, single buffered']
    %10 = vsyncpa [#allocation3], 0
    %11 = vsyncpa [#allocation6], 0
    %12 = vsyncpa [#allocation4], 0
    // Predicated region
    $region2: #{tpu_custom_call.1} parent=1 // pred_check
      _
    $region3: #{tpu_custom_call.1} parent=1 // pred_check_branch
      %14 = sbr.rel (0) target = $region5
    $region4: #{tpu_custom_call.1} parent=1 // pred_region
      %16 = vsyncadd [#allocation3], 0
      %s17 = sshll.u32 %s0, 4
      %s18 = int_to_ptr.hbm [resolvable:$true] %s17
      %s19 = sshll.u32 [#allocation2], 4
      %s20 = int_to_ptr.vmem [resolvable:$true] %s19
      %25 = dma.hbm_to_vmem [thread:$0]  %s18, 256, %s20, [#allocation3], 128, 128, 8
    $region5: #{tpu_custom_call.1} parent=1 // pred_fallthru
      _
    // Predicated region
    $region6: #{tpu_custom_call.1} parent=1 // pred_check
      _
    $region7: #{tpu_custom_call.1} parent=1 // pred_check_branch
      %27 = sbr.rel (0) target = $region9
    $region8: #{tpu_custom_call.1} parent=1 // pred_region
      %29 = vsyncadd [#allocation6], 0
      %s30 = sshll.u32 %s1, 4
      %s31 = int_to_ptr.hbm [resolvable:$true] %s30
      %s32 = sshll.u32 [#allocation5], 4
      %s33 = int_to_ptr.vmem [resolvable:$true] %s32
      %38 = dma.hbm_to_vmem [thread:$0]  %s31, 256, %s33, [#allocation6], 128, 128, 8
    $region9: #{tpu_custom_call.1} parent=1 // pred_fallthru
      _
    // Predicated region
    $region10: #{tpu_custom_call.1} parent=1 // pred_check
      _
    $region11: #{tpu_custom_call.1} parent=1 // pred_check_branch
      %40 = sbr.rel (0) target = $region13
    $region12: #{tpu_custom_call.1} parent=1 // pred_region
      _
    $region13: #{tpu_custom_call.1} parent=1 // pred_fallthru
      _
    // Predicated region
    $region14: #{tpu_custom_call.1} parent=1 // pred_check
      _
    $region15: #{tpu_custom_call.1} parent=1 // pred_check_branch
      %42 = sbr.rel (0) target = $region17
    $region16: #{tpu_custom_call.1} parent=1 // pred_region
      _
    $region17: #{tpu_custom_call.1} parent=1 // pred_fallthru
      _
    // Predicated region
    $region18: #{tpu_custom_call.1} parent=1 // pred_check
      _
    $region19: #{tpu_custom_call.1} parent=1 // pred_check_branch
      %44 = sbr.rel (0) target = $region21
    $region20: #{tpu_custom_call.1} parent=1 // pred_region
      _
    $region21: #{tpu_custom_call.1} parent=1 // pred_fallthru
      _
    // Predicated region
    $region22: #{tpu_custom_call.1} parent=1 // pred_check
      _
    $region23: #{tpu_custom_call.1} parent=1 // pred_check_branch
      %46 = sbr.rel (0) target = $region25
    $region24: #{tpu_custom_call.1} parent=1 // pred_region
      %48 = dma.done [#allocation3], 256
    $region25: #{tpu_custom_call.1} parent=1 // pred_fallthru
      _
    // Predicated region
    $region26: #{tpu_custom_call.1} parent=1 // pred_check
      _
    $region27: #{tpu_custom_call.1} parent=1 // pred_check_branch
      %50 = sbr.rel (0) target = $region29
    $region28: #{tpu_custom_call.1} parent=1 // pred_region
      %52 = dma.done [#allocation6], 256
    $region29: #{tpu_custom_call.1} parent=1 // pred_fallthru
      _
    %v53 = vld [vmem:[#allocation2] sm:$0xff]
    %v54 = vld [vmem:[#allocation2 + $0x8] sm:$0xff]
    %v55 = vld [vmem:[#allocation5] sm:$0xff]
    %v56 = vld [vmem:[#allocation5 + $0x8] sm:$0xff]
    %v57 = vld [vmem:[%s2] sm:$0x1]
    %v59 = vperm.slane %v57, 0
    %vm61 = vcmask 130048
    %v63 = vsel %vm61, %v53, 0
    %v66 = vsel %vm61, %v54, 0
    %68 = vmatpush.msra.mxu0 0.0
    %69 = vmatpush.msra.mxu0 0.0
    %70 = vmatpush.msra.mxu0 0.0
    %71 = vmatpush.msra.mxu0 0.0
    %72 = vmatpush.msra.mxu0 0.0
    %73 = vmatpush.msra.mxu0 0.0
    %74 = vmatpush.msra.mxu0 0.0
    %75 = vmatpush.msra.mxu0 0.0
    %76 = vmatpush.msra.mxu0 0.0
    %77 = vmatpush.msra.mxu0 0.0
    %78 = vmatpush.msra.mxu0 0.0
    %79 = vmatpush.msra.mxu0 0.0
    %80 = vmatpush.msra.mxu0 0.0
    %81 = vmatpush.msra.mxu0 0.0
    %82 = vmatpush.msra.mxu0 %v56
    %83 = vmatpush.msra.mxu0 %v55
    %84 = vmatmul.f32.gmra.mxu0 %v63
    %v85 = vpop.f32.mrf.mxu0
    %v86 = vadd.f32 %v59, %v85
    %87 = vmatmul.f32.gmra.mxu0 %v66
    %v88 = vpop.f32.mrf.mxu0
    %v89 = vadd.f32 %v59, %v88
    %90 = vdwg.mxu0
    %vm91 = vcmask 261120
    %v93 = vsel %vm91, %v86, 0
    %95 = vmatpush.xpose.msra.mxu0 0.0
    %96 = vmatpush.xpose.msra.mxu0 0.0
    %97 = vmatpush.xpose.msra.mxu0 0.0
    %98 = vmatpush.xpose.msra.mxu0 0.0
    %99 = vmatpush.xpose.msra.mxu0 0.0
    %100 = vmatpush.xpose.msra.mxu0 0.0
    %101 = vmatpush.xpose.msra.mxu0 0.0
    %102 = vmatpush.xpose.msra.mxu0 0.0
    %103 = vmatpush.xpose.msra.mxu0 0.0
    %104 = vmatpush.xpose.msra.mxu0 0.0
    %105 = vmatpush.xpose.msra.mxu0 0.0
    %106 = vmatpush.xpose.msra.mxu0 0.0
    %107 = vmatpush.xpose.msra.mxu0 0.0
    %108 = vmatpush.xpose.msra.mxu0 0.0
    %109 = vmatpush.xpose.msra.mxu0 0.0
    %110 = vmatpush.xpose.msra.mxu0 %v93
    %111 = vmatmul.f32.gmra.mxu0 %v93
    %v112 = vpop.f32.mrf.mxu0
    %v113 = vadd.f32 0.0, %v112
    %114 = vdwg.mxu0
    %v116 = vsel %vm91, %v89, 0
    %118 = vmatpush.xpose.msra.mxu0 0.0
    %119 = vmatpush.xpose.msra.mxu0 0.0
    %120 = vmatpush.xpose.msra.mxu0 0.0
    %121 = vmatpush.xpose.msra.mxu0 0.0
    %122 = vmatpush.xpose.msra.mxu0 0.0
    %123 = vmatpush.xpose.msra.mxu0 0.0
    %124 = vmatpush.xpose.msra.mxu0 0.0
    %125 = vmatpush.xpose.msra.mxu0 0.0
    %126 = vmatpush.xpose.msra.mxu0 0.0
    %127 = vmatpush.xpose.msra.mxu0 0.0
    %128 = vmatpush.xpose.msra.mxu0 0.0
    %129 = vmatpush.xpose.msra.mxu0 0.0
    %130 = vmatpush.xpose.msra.mxu0 0.0
    %131 = vmatpush.xpose.msra.mxu0 0.0
    %132 = vmatpush.xpose.msra.mxu0 0.0
    %133 = vmatpush.xpose.msra.mxu0 %v116
    %134 = vmatmul.f32.gmra.mxu0 %v116
    %v135 = vpop.f32.mrf.mxu0
    %v136 = vadd.f32 0.0, %v135
    %137 = vdwg.mxu0
    %vm138 = vcmask 64512
    %v139 = vsel %vm138, %v113, -inf
    %140 = vmax.xlane.f32.xlu0 %v139
    %v141 = vpop.xlane.xlu0 %140
    %v142 = vsel %vm138, %v136, -inf
    %143 = vmax.xlane.f32.xlu0 %v142
    %v144 = vpop.xlane.xlu0 %143
    %v145 = vsub.f32 %v113, %v141
    %v146 = vsub.f32 %v136, %v144
    %v147 = vmul.f32 %v145, 1.442695
    %v148 = vpow.pop %v147
    %v149 = vmul.f32 %v146, 1.442695
    %v150 = vpow.pop %v149
    %v151 = vsel %vm138, %v148, 0.0
    %152 = vadd.xlane.f32.xlu0 %v151
    %v153 = vpop.xlane.xlu0 %152
    %v154 = vsel %vm138, %v150, 0.0
    %155 = vadd.xlane.f32.xlu0 %v154
    %v156 = vpop.xlane.xlu0 %155
    %v157 = vrcp.pop %v153
    %v158 = vmul.f32 %v153, %v157
    %v159 = vsub.f32 1.0, %v158
    %v160 = vmul.f32 %v157, %v159
    %v161 = vadd.f32 %v157, %v160
    %vm162 = vweird.f32 %v153
    %vm163 = vweird.f32 %v157
    %vm164 = vmor %vm162, %vm163
    %v165 = vsel %vm164, %v157, %v161
    %v166 = vand.u32 2147483647, %v153
    %vm167 = vcmp.eq.f32.partialorder %v166, 8.507059e+37
    %v168 = vand.u32 %v153, 2147483648
    %v169 = vor.u32 1.1754944e-38, %v168
    %v170 = vsel %vm167, %v169, %v165
    %v171 = vmul.f32 %v148, %v170
    %v172 = vrcp.pop %v156
    %v173 = vmul.f32 %v156, %v172
    %v174 = vsub.f32 1.0, %v173
    %v175 = vmul.f32 %v172, %v174
    %v176 = vadd.f32 %v172, %v175
    %vm177 = vweird.f32 %v156
    %vm178 = vweird.f32 %v172
    %vm179 = vmor %vm177, %vm178
    %v180 = vsel %vm179, %v172, %v176
    %v181 = vand.u32 2147483647, %v156
    %vm182 = vcmp.eq.f32.partialorder %v181, 8.507059e+37
    %v183 = vand.u32 %v156, 2147483648
    %v184 = vor.u32 1.1754944e-38, %v183
    %v185 = vsel %vm182, %v184, %v180
    %v186 = vmul.f32 %v150, %v185
    %v188 = vsel %vm138, %v171, 0
    %190 = vmatpush.msra.mxu0 0.0
    %191 = vmatpush.msra.mxu0 0.0
    %192 = vmatpush.msra.mxu0 0.0
    %193 = vmatpush.msra.mxu0 0.0
    %194 = vmatpush.msra.mxu0 0.0
    %195 = vmatpush.msra.mxu0 0.0
    %196 = vmatpush.msra.mxu0 0.0
    %197 = vmatpush.msra.mxu0 0.0
    %198 = vmatpush.msra.mxu0 0.0
    %199 = vmatpush.msra.mxu0 0.0
    %200 = vmatpush.msra.mxu0 0.0
    %201 = vmatpush.msra.mxu0 0.0
    %202 = vmatpush.msra.mxu0 0.0
    %203 = vmatpush.msra.mxu0 0.0
    %204 = vmatpush.msra.mxu0 0.0
    %205 = vmatpush.msra.mxu0 %v86
    %206 = vmatmul.f32.gmra.mxu0 %v188
    %v207 = vpop.f32.mrf.mxu0
    %v208 = vadd.f32 %v86, %v207
    %209 = vdwg.mxu0
    %v211 = vsel %vm138, %v186, 0
    %213 = vmatpush.msra.mxu0 0.0
    %214 = vmatpush.msra.mxu0 0.0
    %215 = vmatpush.msra.mxu0 0.0
    %216 = vmatpush.msra.mxu0 0.0
    %217 = vmatpush.msra.mxu0 0.0
    %218 = vmatpush.msra.mxu0 0.0
    %219 = vmatpush.msra.mxu0 0.0
    %220 = vmatpush.msra.mxu0 0.0
    %221 = vmatpush.msra.mxu0 0.0
    %222 = vmatpush.msra.mxu0 0.0
    %223 = vmatpush.msra.mxu0 0.0
    %224 = vmatpush.msra.mxu0 0.0
    %225 = vmatpush.msra.mxu0 0.0
    %226 = vmatpush.msra.mxu0 0.0
    %227 = vmatpush.msra.mxu0 0.0
    %228 = vmatpush.msra.mxu0 %v89
    %229 = vmatmul.f32.gmra.mxu0 %v211
    %v230 = vpop.f32.mrf.mxu0
    %v231 = vadd.f32 %v89, %v230
    %232 = vdwg.mxu0
    %v233 = vsel %vm91, %v208, 0.0
    %234 = vadd.xlane.f32.xlu0 %v233
    %v235 = vpop.xlane.xlu0 %234
    %v236 = vsel %vm91, %v231, 0.0
    %237 = vadd.xlane.f32.xlu0 %v236
    %v238 = vpop.xlane.xlu0 %237
    %v239 = vrcp.pop 32.0
    %v240 = vmul.f32 32.0, %v239
    %v241 = vsub.f32 1.0, %v240
    %v242 = vmul.f32 %v239, %v241
    %v243 = vadd.f32 %v239, %v242
    %vm244 = vweird.f32 %v239
    %v245 = vsel %vm244, %v239, %v243
    %v246 = vmul.f32 %v235, %v245
    %v247 = vmul.f32 %v238, %v245
    %v248 = vsub.f32 %v208, %v246
    %v249 = vsub.f32 %v231, %v247
    %v250 = vmul.f32 %v248, %v248
    %v251 = vmul.f32 %v249, %v249
    %v252 = vsel %vm91, %v250, 0.0
    %253 = vadd.xlane.f32.xlu0 %v252
    %v254 = vpop.xlane.xlu0 %253
    %v255 = vsel %vm91, %v251, 0.0
    %256 = vadd.xlane.f32.xlu0 %v255
    %v257 = vpop.xlane.xlu0 %256
    %v258 = vmul.f32 %v254, %v245
    %v259 = vmul.f32 %v257, %v245
    %v260 = vadd.f32 %v258, 1e-05
    %v261 = vadd.f32 %v259, 1e-05
    %v262 = vrsqrt.pop %v260
    %v263 = vmul.f32 %v262, %v260
    %v264 = vmul.f32 %v263, %v262
    %v265 = vmul.f32 0.5, %v264
    %v266 = vsub.f32 1.5, %v265
    %v267 = vmul.f32 %v262, %v266
    %vm268 = vweird.f32 %v260
    %vm269 = vweird.f32 %v262
    %vm270 = vmor %vm268, %vm269
    %v271 = vsel %vm270, %v262, %v267
    %v272 = vrsqrt.pop %v261
    %v273 = vmul.f32 %v272, %v261
    %v274 = vmul.f32 %v273, %v272
    %v275 = vmul.f32 0.5, %v274
    %v276 = vsub.f32 1.5, %v275
    %v277 = vmul.f32 %v272, %v276
    %vm278 = vweird.f32 %v261
    %vm279 = vweird.f32 %v272
    %vm280 = vmor %vm278, %vm279
    %v281 = vsel %vm280, %v272, %v277
    %v282 = vmul.f32 %v248, %v271
    %v283 = vmul.f32 %v249, %v281
    %v284 = vld [vmem:[%s3] sm:$0x1]
    %v286 = vperm.slane %v284, 0
    %v288 = vmul.f32 %v282, %v286
    %v289 = vmul.f32 %v283, %v286
    %v290 = vld [vmem:[%s4] sm:$0x1]
    %v292 = vperm.slane %v290, 0
    %v294 = vadd.f32 %v288, %v292
    %v295 = vadd.f32 %v289, %v292
    %296 = vst.msk [vmem:[#allocation7] sm:$0xff] %vm91, %v294
    %297 = vst.msk [vmem:[#allocation7 + $0x8] sm:$0xff] %vm91, %v295
    // Predicated region
    $region30: #{tpu_custom_call.1} parent=1 // pred_check
      _
    $region31: #{tpu_custom_call.1} parent=1 // pred_check_branch
      %299 = sbr.rel (0) target = $region33
    $region32: #{tpu_custom_call.1} parent=1 // pred_region
      %301 = vsyncadd [#allocation4], 0
      %s302 = sshll.u32 [#allocation7], 4
      %s303 = int_to_ptr.vmem [resolvable:$true] %s302
      %s304 = sshll.u32 %s5, 4
      %s305 = int_to_ptr.hbm [resolvable:$true] %s304
      %310 = dma.vmem_to_hbm [thread:$0]  %s303, 256, %s305, [#allocation4], 128, 128, 8
    $region33: #{tpu_custom_call.1} parent=1 // pred_fallthru
      _
    // Predicated region
    $region34: #{tpu_custom_call.1} parent=1 // pred_check
      _
    $region35: #{tpu_custom_call.1} parent=1 // pred_check_branch
      %312 = sbr.rel (0) target = $region37
    $region36: #{tpu_custom_call.1} parent=1 // pred_region
      %314 = dma.done [#allocation4], 256
    $region37: #{tpu_custom_call.1} parent=1 // pred_fallthru
      _
    %315 = vsyncpa [#allocation3], 1
    %316 = vsyncpa [#allocation6], 1
    %317 = vsyncpa [#allocation4], 1

</llo_original>
